<compile_context>
chip_gen: v7x
topology: tpu7x:2x2x1
jax: 0.10.0
libtpu: 0.0.40
codegen_flags: <defaults>
</compile_context>

<pallas_src>
import functools
import math

import jax
import jax.numpy as jnp
from jax.experimental import pallas as pl
from jax.experimental.pallas import tpu as pltpu

F32_EPS = 1.1920928955078125e-07  # torch.finfo(torch.float32).eps (F.rms_norm default)
LANE = 128


def _round_up(x, m):
    return ((x + m - 1) // m) * m


def _tile(dim, target, align):
    """Largest `align`-aligned tile <= target that divides dim (or the full dim)."""
    if dim <= target:
        return dim
    t = (target // align) * align
    while t >= align:
        if dim % t == 0:
            return t
        t -= align
    return dim


def _cparams(sem, need_bytes):
    """CompilerParams with an explicit scoped-VMEM budget (cap 64 MiB for v7x)."""
    vmem = int(min(64 << 20, max(32 << 20, int(1.5 * need_bytes) + (2 << 20))))
    return pltpu.CompilerParams(dimension_semantics=sem, vmem_limit_bytes=vmem)


# --------------------------------------------------------------------------- #
# Kernel 1: fused RMSNorm + matmul  (QKV projection, final logits)            #
# --------------------------------------------------------------------------- #
def _rmsnorm_matmul_kernel(x_ref, w_ref, o_ref, *, eps):
    x = x_ref[...]                                             # (tm, K) f32
    ms = jnp.mean(x * x, axis=-1, keepdims=True)
    xn = (x * jax.lax.rsqrt(ms + eps)).astype(w_ref.dtype)     # bf16 for the MXU
    o_ref[...] = jnp.dot(xn, w_ref[...],
                         preferred_element_type=jnp.float32).astype(o_ref.dtype)


def rmsnorm_matmul(x, w, *, out_dtype=jnp.bfloat16, eps=F32_EPS,
                   tm_target=256, tn_target=512):
    # TODO(synk): for very large K (D >= 8k) switch to a K-tiled variant with a
    # precomputed per-row inv-rms and a VMEM accumulator (v7x 64 MiB budget).
    M, K = x.shape
    K2, N = w.shape
    assert K == K2
    tm = _tile(M, tm_target, 16)
    tn = _tile(N, tn_target, 128)
    out_b = jnp.dtype(out_dtype).itemsize
    need = 2 * (tm * K * 4) + 2 * (K * tn * 2) + 2 * (tm * tn * out_b)
    return pl.pallas_call(
        functools.partial(_rmsnorm_matmul_kernel, eps=eps),
        out_shape=jax.ShapeDtypeStruct((M, N), out_dtype),
        grid=(M // tm, N // tn),
        in_specs=[pl.BlockSpec((tm, K), lambda i, j: (i, 0)),
                  pl.BlockSpec((K, tn), lambda i, j: (0, j))],
        out_specs=pl.BlockSpec((tm, tn), lambda i, j: (i, j)),
        compiler_params=_cparams(("parallel", "parallel"), need),
        cost_estimate=pl.CostEstimate(
            flops=2 * M * N * K, transcendentals=0,
            bytes_accessed=4 * M * K + 2 * K * N + out_b * M * N),
    )(x, w)


# --------------------------------------------------------------------------- #
# Kernel 2: fused RMSNorm + fc1/fc2 + SiLU gating (SwiGLU), bf16 output       #
# --------------------------------------------------------------------------- #
def _rmsnorm_swiglu_kernel(x_ref, w1_ref, w2_ref, o_ref, *, eps):
    x = x_ref[...]
    ms = jnp.mean(x * x, axis=-1, keepdims=True)
    xn = (x * jax.lax.rsqrt(ms + eps)).astype(w1_ref.dtype)
    x1 = jnp.dot(xn, w1_ref[...], preferred_element_type=jnp.float32)
    x2 = jnp.dot(xn, w2_ref[...], preferred_element_type=jnp.float32)
    sig = pl.reciprocal(1.0 + jnp.exp(-x1), approx=True)       # EUP slot, ~free
    o_ref[...] = (x1 * sig * x2).astype(o_ref.dtype)


def rmsnorm_swiglu(x, w1, w2, *, eps=F32_EPS, tm_target=256, tn_target=512):
    M, K = x.shape
    K2, N = w1.shape
    assert K == K2 and w2.shape == w1.shape
    tm = _tile(M, tm_target, 16)
    tn = _tile(N, tn_target, 128)
    need = 2 * (tm * K * 4) + 4 * (K * tn * 2) + 2 * (tm * tn * 2)
    return pl.pallas_call(
        functools.partial(_rmsnorm_swiglu_kernel, eps=eps),
        out_shape=jax.ShapeDtypeStruct((M, N), jnp.bfloat16),
        grid=(M // tm, N // tn),
        in_specs=[pl.BlockSpec((tm, K), lambda i, j: (i, 0)),
                  pl.BlockSpec((K, tn), lambda i, j: (0, j)),
                  pl.BlockSpec((K, tn), lambda i, j: (0, j))],
        out_specs=pl.BlockSpec((tm, tn), lambda i, j: (i, j)),
        compiler_params=_cparams(("parallel", "parallel"), need),
        cost_estimate=pl.CostEstimate(
            flops=4 * M * N * K, transcendentals=M * N,
            bytes_accessed=4 * M * K + 4 * K * N + 2 * M * N),
    )(x, w1, w2)


# --------------------------------------------------------------------------- #
# Kernel 3: K-tiled matmul with VMEM accumulator + fused residual add         #
# (c_proj: h = h + gated @ W_proj); bf16 inputs, f32 accumulation             #
# --------------------------------------------------------------------------- #
def _matmul_residual_kernel(a_ref, b_ref, r_ref, o_ref, acc_ref):
    @pl.when(pl.program_id(2) == 0)
    def _():
        acc_ref[...] = jnp.zeros_like(acc_ref)

    acc_ref[...] += jnp.dot(a_ref[...], b_ref[...],
                            preferred_element_type=jnp.float32)

    @pl.when(pl.program_id(2) == pl.num_programs(2) - 1)
    def _():
        o_ref[...] = acc_ref[...] + r_ref[...]


def matmul_residual(a, w, res, *, tm_target=256, tn_target=512, tk_target=512):
    M, K = a.shape
    K2, N = w.shape
    assert K == K2 and res.shape == (M, N)
    tm = _tile(M, tm_target, 16)
    tn = _tile(N, tn_target, 128)
    tk = _tile(K, tk_target, 128)
    need = (2 * (tm * tk * 2 + tk * tn * 2 + tm * tn * 4)
            + 2 * tm * tn * 4 + tm * tn * 4)
    return pl.pallas_call(
        _matmul_residual_kernel,
        out_shape=jax.ShapeDtypeStruct((M, N), jnp.float32),
        grid=(M // tm, N // tn, K // tk),
        in_specs=[pl.BlockSpec((tm, tk), lambda i, j, k: (i, k)),
                  pl.BlockSpec((tk, tn), lambda i, j, k: (k, j)),
                  pl.BlockSpec((tm, tn), lambda i, j, k: (i, j))],
        out_specs=pl.BlockSpec((tm, tn), lambda i, j, k: (i, j)),
        scratch_shapes=[pltpu.VMEM((tm, tn), jnp.float32)],
        compiler_params=_cparams(("parallel", "parallel", "arbitrary"), need),
        cost_estimate=pl.CostEstimate(
            flops=2 * M * N * K, transcendentals=0,
            bytes_accessed=2 * M * K + 2 * K * N + 8 * M * N),
    )(a, w, res)


# --------------------------------------------------------------------------- #
# Kernel 4: TPA rank contraction + RoPE -> packed bf16 q / k / v              #
# grid (B, S-tile); RoPE is NeoX rotate-half on pre-permuted weights with the #
# sign folded into the sin table (no duplicated weight columns).              #
# --------------------------------------------------------------------------- #
def _qkv_build_kernel(proj_ref, cos_ref, sin_ref, q_ref, k_ref, v_ref,
                      *, H, Dh, QR, R, offs):
    p = proj_ref[0]                                  # (tS, PW) bf16
    S = p.shape[0]
    cos = cos_ref[...]                               # (tS, Dh)   [c | c]
    sin = sin_ref[...]                               # (tS, Dh)  [-s | s]
    oAq, oAk, oAv, oBq, oBk, oBv = offs
    half = Dh // 2

    def contract(a_off, b_off, rank, rope):
        # out[s, h, d] = sum_r A[s, r*H+h] * rope(B)[s, r*Dh+d]
        # (1/rank and softmax scale already folded into the A weight columns)
        acc = jnp.zeros((S, H, Dh), jnp.float32)
        for r in range(rank):
            a_r = p[:, a_off + r * H: a_off + (r + 1) * H].astype(jnp.float32)
            b_r = p[:, b_off + r * Dh: b_off + (r + 1) * Dh].astype(jnp.float32)
            if rope:
                b_rot = jnp.concatenate([b_r[:, half:], b_r[:, :half]], axis=-1)
                b_r = b_r * cos + b_rot * sin
            acc = acc + a_r[:, :, None] * b_r[:, None, :]
        return acc

    def pack(x3, ref):
        # TODO(synk): for Dh < 128 configs a packed (S, H*Dh) contraction would
        # be more lane-dense; with Dh = 128 (production) this layout is dense.
        flat = jnp.concatenate([x3[:, h, :] for h in range(H)], axis=1)
        ref[0] = flat.astype(ref.dtype)

    pack(contract(oAq, oBq, QR, True), q_ref)
    pack(contract(oAk, oBk, R, True), k_ref)
    pack(contract(oAv, oBv, R, False), v_ref)


def qkv_build(proj3, cos2, sin2, offs, cfg, *, ts_target=256):
    B, S, PW = proj3.shape
    H, Dh, QR, R = cfg["n_heads"], cfg["head_dim"], cfg["q_rank"], cfg["rank"]
    D = H * Dh
    tS = _tile(S, ts_target, 8)
    need = 2 * (tS * PW * 2 + 2 * tS * Dh * 4 + 3 * tS * D * 2) + 3 * tS * D * 4
    out_sds = jax.ShapeDtypeStruct((B, S, D), jnp.bfloat16)
    return pl.pallas_call(
        functools.partial(_qkv_build_kernel, H=H, Dh=Dh, QR=QR, R=R, offs=offs),
        out_shape=(out_sds, out_sds, out_sds),
        grid=(B, S // tS),
        in_specs=[pl.BlockSpec((1, tS, PW), lambda b, si: (b, si, 0)),
                  pl.BlockSpec((tS, Dh), lambda b, si: (si, 0)),
                  pl.BlockSpec((tS, Dh), lambda b, si: (si, 0))],
        out_specs=(pl.BlockSpec((1, tS, D), lambda b, si: (b, si, 0)),) * 3,
        compiler_params=_cparams(("parallel", "parallel"), need),
        cost_estimate=pl.CostEstimate(
            flops=int(3 * B * S * (QR + 2 * R) * H * Dh),
            transcendentals=0,
            bytes_accessed=int(2 * B * S * PW + 6 * B * S * D)),
    )(proj3, cos2, sin2)


# --------------------------------------------------------------------------- #
# Kernel 5: flash-style causal attention + fused residual add                 #
# grid (B, head-group, q-tile) "parallel" x kv-tile "arbitrary";              #
# online softmax in VMEM scratch, bf16 MXU inputs, f32 accumulation.          #
# --------------------------------------------------------------------------- #
def _flash_attn_kernel(q_ref, k_ref, v_ref, res_ref, o_ref, m_sc, l_sc, acc_sc,
                       *, G, Dh, tq, tkv):
    qi = pl.program_id(2)
    ki = pl.program_id(3)

    @pl.when(ki == 0)
    def _():
        m_sc[...] = jnp.full_like(m_sc, -jnp.inf)
        l_sc[...] = jnp.zeros_like(l_sc)
        acc_sc[...] = jnp.zeros_like(acc_sc)

    @pl.when(ki * tkv <= qi * tq + (tq - 1))         # skip fully-masked KV blocks
    def _():
        row = qi * tq + jax.lax.broadcasted_iota(jnp.int32, (tq, tkv), 0)
        col = ki * tkv + jax.lax.broadcasted_iota(jnp.int32, (tq, tkv), 1)
        allowed = col <= row                          # causal, start_pos == 0
        for g in range(G):
            qg = q_ref[0, :, g * Dh:(g + 1) * Dh]     # (tq, Dh)  bf16
            kg = k_ref[0, :, g * Dh:(g + 1) * Dh]     # (tkv, Dh) bf16
            vg = v_ref[0, :, g * Dh:(g + 1) * Dh]     # (tkv, Dh) bf16
            s = jax.lax.dot_general(qg, kg, (((1,), (1,)), ((), ())),
                                    preferred_element_type=jnp.float32)
            s = jnp.where(allowed, s, -1e30)
            m_prev = m_sc[:, g:g + 1]
            m_new = jnp.maximum(m_prev, jnp.max(s, axis=-1, keepdims=True))
            alpha = jnp.exp(m_prev - m_new)
            p = jnp.exp(s - m_new)
            l_sc[:, g:g + 1] = alpha * l_sc[:, g:g + 1] + jnp.sum(
                p, axis=-1, keepdims=True)
            acc_sc[:, g * Dh:(g + 1) * Dh] = (
                alpha * acc_sc[:, g * Dh:(g + 1) * Dh]
                + jnp.dot(p.astype(vg.dtype), vg,
                          preferred_element_type=jnp.float32))
            m_sc[:, g:g + 1] = m_new

    @pl.when(ki == pl.num_programs(3) - 1)
    def _():
        inv_l = pl.reciprocal(l_sc[...], approx=True)        # (tq, G), EUP slot
        acc = acc_sc[...]
        pieces = [acc[:, g * Dh:(g + 1) * Dh] * inv_l[:, g:g + 1]
                  for g in range(G)]
        attn = pieces[0] if G == 1 else jnp.concatenate(pieces, axis=1)
        o_ref[0] = res_ref[0] + attn                         # residual fused here


def _heads_per_group(H, Dh):
    """Heads per kernel block so the block lane-width is 128-aligned (or = D)."""
    if Dh % LANE == 0:
        return 1
    if LANE % Dh == 0 and H % (LANE // Dh) == 0:
        return LANE // Dh
    return H


def flash_attention(q, k, v, h_res, cfg, *, tq_target=256, tkv_target=256):
    B, S, D = q.shape
    H, Dh = cfg["n_heads"], cfg["head_dim"]
    G = _heads_per_group(H, Dh)
    GW = G * Dh
    n_groups = H // G
    tq = _tile(S, tq_target, 8)
    tkv = _tile(S, tkv_target, 8)
    need = (2 * ((tq + 2 * tkv) * GW * 2 + 2 * tq * GW * 4)
            + tq * (2 * G + GW) * 4 + 4 * tq * tkv * 4)
    kern = functools.partial(_flash_attn_kernel, G=G, Dh=Dh, tq=tq, tkv=tkv)
    return pl.pallas_call(
        kern,
        out_shape=jax.ShapeDtypeStruct((B, S, D), jnp.float32),
        grid=(B, n_groups, S // tq, S // tkv),
        in_specs=[pl.BlockSpec((1, tq, GW), lambda b, g, qi, ki: (b, qi, g)),
                  pl.BlockSpec((1, tkv, GW), lambda b, g, qi, ki: (b, ki, g)),
                  pl.BlockSpec((1, tkv, GW), lambda b, g, qi, ki: (b, ki, g)),
                  pl.BlockSpec((1, tq, GW), lambda b, g, qi, ki: (b, qi, g))],
        out_specs=pl.BlockSpec((1, tq, GW), lambda b, g, qi, ki: (b, qi, g)),
        scratch_shapes=[pltpu.VMEM((tq, G), jnp.float32),
                        pltpu.VMEM((tq, G), jnp.float32),
                        pltpu.VMEM((tq, GW), jnp.float32)],
        compiler_params=_cparams(
            ("parallel", "parallel", "parallel", "arbitrary"), need),
        cost_estimate=pl.CostEstimate(
            flops=int(4 * B * H * S * S * Dh),
            transcendentals=int(B * H * S * S),
            bytes_accessed=int(6 * B * S * D + 8 * B * S * D)),
    )(q, k, v, h_res)


# --------------------------------------------------------------------------- #
# Host-side glue: weight fusion, padding, RoPE tables, layer loop             #
# --------------------------------------------------------------------------- #
def precompute_rope(head_dim, end, theta):
    freqs = 1.0 / (theta ** (jnp.arange(0, head_dim, 2)[: head_dim // 2]
                             .astype(jnp.float32) / head_dim))
    t = jnp.arange(end, dtype=jnp.float32)
    ang = jnp.outer(t, freqs)                         # (end, Dh/2)
    return jnp.cos(ang), jnp.sin(ang)


def rope_tables(cos, sin):
    # NeoX-layout tables matching the host-side permutation of W_B_q / W_B_k:
    #   cos2 = [cos | cos]   sin2 = [-sin | sin]  (rotate-half sign folded in)
    return (jnp.concatenate([cos, cos], axis=-1),
            jnp.concatenate([-sin, sin], axis=-1))


def _rank_major(w, H, rank):
    """(D, H*rank) head-major columns -> rank-major (r, h) order."""
    D = w.shape[0]
    return w.reshape(D, H, rank).transpose(0, 2, 1).reshape(D, H * rank)


def _neox_permute(w, rank, Dh):
    """Within each rank segment, permute head_dim from interleaved to [evens|odds]."""
    D = w.shape[0]
    w3 = w.reshape(D, rank, Dh)
    return jnp.concatenate([w3[:, :, 0::2], w3[:, :, 1::2]],
                           axis=-1).reshape(D, rank * Dh)


def _pad_cols(w, n):
    pad = n - w.shape[1]
    return w if pad == 0 else jnp.concatenate(
        [w, jnp.zeros((w.shape[0], pad), w.dtype)], axis=1)


def _pad_rows(w, n):
    pad = n - w.shape[0]
    return w if pad == 0 else jnp.concatenate(
        [w, jnp.zeros((pad, w.shape[1]), w.dtype)], axis=0)


def _fuse_qkv(raw, cfg):
    """One wide lane-dense QKV weight; each segment starts on a 128-lane boundary."""
    H, QR, R, Dh = cfg["n_heads"], cfg["q_rank"], cfg["rank"], cfg["head_dim"]
    D = raw["W_A_q"].shape[0]
    segs = [
        # fold 1/q_rank, 1/rank and the softmax 1/sqrt(Dh) into the A factors
        _rank_major(raw["W_A_q"], H, QR) * (1.0 / (QR * math.sqrt(Dh))),
        _rank_major(raw["W_A_k"], H, R) * (1.0 / R),
        _rank_major(raw["W_A_v"], H, R) * (1.0 / R),
        _neox_permute(raw["W_B_q"], QR, Dh),
        _neox_permute(raw["W_B_k"], R, Dh),
        raw["W_B_v"],
    ]
    cols, offs, off = [], [], 0
    for s in segs:
        offs.append(off)
        cols.append(s)
        w = s.shape[1]
        pad = _round_up(w, LANE) - w
        if pad:
            cols.append(jnp.zeros((D, pad), s.dtype))
        off += w + pad
    return jnp.concatenate(cols, axis=1).astype(jnp.bfloat16), tuple(offs)


def t6_block(lp, h, rope_tabs, cfg):
    B, S, D = h.shape
    N = B * S
    cos2, sin2 = rope_tabs

    # ---- attention sub-block: h = h + TPA(rms_norm(h)) ----
    proj = rmsnorm_matmul(h.reshape(N, D), lp["w_qkv"])            # (N, PW) bf16
    q, k, v = qkv_build(proj.reshape(B, S, -1), cos2, sin2, lp["qkv_offs"], cfg)
    h = flash_attention(q, k, v, h, cfg)                           # residual fused

    # ---- MLP sub-block: h = h + c_proj(silu(fc1(x)) * fc2(x)), x = rms_norm(h) ----
    h2d = h.reshape(N, D)
    gated = rmsnorm_swiglu(h2d, lp["c_fc1"], lp["c_fc2"])          # (N, hid_pad) bf16
    h2d = matmul_residual(gated, lp["c_proj"], h2d)                # residual fused
    return h2d.reshape(B, S, D)


def t6_forward(params, tokens, start_pos=0):
    assert start_pos == 0, "only the prefill path (start_pos=0) is implemented"
    cfg = params["cfg"]
    B, S = tokens.shape
    D, V = cfg["dim"], cfg["vocab_size"]

    # TODO(synk): embedding gather stays in plain JAX (no clean tiny-shape Pallas gather).
    h = jnp.take(params["tok_emb"], tokens, axis=0).astype(jnp.float32)   # (B, S, D)

    cos = params["rope_cos"][start_pos:start_pos + S]
    sin = params["rope_sin"][start_pos:start_pos + S]
    tabs = rope_tables(cos, sin)

    for lp in params["layers"]:
        h = t6_block(lp, h, tabs, cfg)

    logits = rmsnorm_matmul(h.reshape(B * S, D), params["w_out"],
                            out_dtype=jnp.float32)                  # (N, V_pad)
    return logits[:, :V].reshape(B, S, V)


def init_params(key, cfg):
    D, H, Dh = cfg["dim"], cfg["n_heads"], cfg["head_dim"]
    QR, R = cfg["q_rank"], cfg["rank"]
    hidden = math.floor(8 / 3 * D)
    hid_pad = _round_up(hidden, LANE)
    V = cfg["vocab_size"]
    v_pad = _round_up(V, LANE)
    assert H * Dh == D and Dh % 2 == 0

    def nrm(k, shape, scale=0.05):
        return scale * jax.random.normal(k, shape, jnp.float32)

    keys = jax.random.split(key, 2 + cfg["n_layers"])
    params = {
        "cfg": cfg,
        "tok_emb": nrm(keys[0], (V, D), 0.1),
        "w_out": _pad_cols(nrm(keys[1], (D, V)), v_pad).astype(jnp.bfloat16),
        "layers": [],
    }
    for l in range(cfg["n_layers"]):
        lk = jax.random.split(keys[2 + l], 9)
        raw = {
            # reference layout: columns ordered (head, rank) for A, (rank, head_dim) for B
            "W_A_q": nrm(lk[0], (D, H * QR)),
            "W_A_k": nrm(lk[1], (D, H * R)),
            "W_A_v": nrm(lk[2], (D, H * R)),
            "W_B_q": nrm(lk[3], (D, QR * Dh)),
            "W_B_k": nrm(lk[4], (D, R * Dh)),
            "W_B_v": nrm(lk[5], (D, R * Dh)),
        }
        w_qkv, offs = _fuse_qkv(raw, cfg)
        params["layers"].append({
            "w_qkv": w_qkv,
            "qkv_offs": offs,
            "c_fc1": _pad_cols(nrm(lk[6], (D, hidden)), hid_pad).astype(jnp.bfloat16),
            "c_fc2": _pad_cols(nrm(lk[7], (D, hidden)), hid_pad).astype(jnp.bfloat16),
            # note: reference zero-inits c_proj; small random here for a non-trivial test.
            "c_proj": _pad_rows(nrm(lk[8], (hidden, D)), hid_pad).astype(jnp.bfloat16),
        })
    cos, sin = precompute_rope(Dh, cfg["max_seq_len"] * 2, cfg["rope_theta"])
    params["rope_cos"] = cos
    params["rope_sin"] = sin
    return params


if __name__ == "__main__":
    cfg = dict(
        dim=32,
        n_layers=2,
        n_heads=4,
        head_dim=32 // 4,
        vocab_size=64,
        q_rank=12,
        rank=2,
        max_seq_len=16,
        rope_theta=10000.0,
    )
    key = jax.random.PRNGKey(0)
    pkey, tkey = jax.random.split(key)
    params = init_params(pkey, cfg)
    tokens = jax.random.randint(tkey, (2, 8), 0, cfg["vocab_size"], dtype=jnp.int32)

    logits = t6_forward(params, tokens, start_pos=0)
    logits = jax.block_until_ready(logits)

    assert logits.shape == (2, 8, cfg["vocab_size"])
    assert logits.dtype == jnp.float32
    assert bool(jnp.all(jnp.isfinite(logits)))
    print("KERNEL_OK")
</pallas_src>

<mosaic_0001>
module attributes {stable_mosaic.version = 11 : i64} {
  func.func @_rmsnorm_matmul_kernel(%arg0: i32, %arg1: i32, %arg2: memref<16x32xf32, #tpu.memory_space<vmem>>, %arg3: memref<32x384xbf16, #tpu.memory_space<vmem>>, %arg4: memref<16x384xbf16, #tpu.memory_space<vmem>>) attributes {dimension_semantics = [#tpu.dimension_semantics<parallel>, #tpu.dimension_semantics<parallel>], iteration_bounds = array<i64: 1, 2>, scalar_prefetch = 0 : i64, scratch_operands = 0 : i64, tpu.core_type = #tpu.core_type<tc>, window_params = [{transform_indices = @transform_0, window_bounds = array<i64: 16, 32>}, {transform_indices = @transform_1, window_bounds = array<i64: 32, 384>}, {transform_indices = @transform_2, window_bounds = array<i64: 16, 384>}]} {
    %c0 = arith.constant 0 : index
    %c0_0 = arith.constant 0 : index
    %0 = vector.load %arg2[%c0, %c0_0] : memref<16x32xf32, #tpu.memory_space<vmem>>, vector<16x32xf32>
    %1 = arith.mulf %0, %0 : vector<16x32xf32>
    %cst = arith.constant dense<0.000000e+00> : vector<16xf32>
    %2 = vector.multi_reduction <add>, %1, %cst [1] : vector<16x32xf32> to vector<16xf32>
    %3 = vector.shape_cast %2 : vector<16xf32> to vector<16x1xf32>
    %cst_1 = arith.constant 3.200000e+01 : f32
    %4 = vector.broadcast %cst_1 : f32 to vector<16x1xf32>
    %5 = arith.divf %3, %4 : vector<16x1xf32>
    %cst_2 = arith.constant 1.1920929E-7 : f32
    %6 = vector.broadcast %cst_2 : f32 to vector<16x1xf32>
    %7 = arith.addf %5, %6 : vector<16x1xf32>
    %8 = math.rsqrt %7 : vector<16x1xf32>
    %9 = vector.broadcast %8 : vector<16x1xf32> to vector<16x32xf32>
    %10 = arith.mulf %0, %9 : vector<16x32xf32>
    %11 = arith.truncf %10 : vector<16x32xf32> to vector<16x32xbf16>
    %c0_3 = arith.constant 0 : index
    %c0_4 = arith.constant 0 : index
    %12 = vector.load %arg3[%c0_3, %c0_4] : memref<32x384xbf16, #tpu.memory_space<vmem>>, vector<32x384xbf16>
    %cst_5 = arith.constant dense<0.000000e+00> : vector<16x384xf32>
    %13 = tpu.matmul %11, %12, %cst_5 {dimension_numbers = #tpu.dot_dimension_numbers<[1], [0], [0], [1], [0, 0, 1, 1], [], []>} : vector<16x32xbf16>, vector<32x384xbf16>, vector<16x384xf32> -> vector<16x384xf32>
    %14 = arith.truncf %13 : vector<16x384xf32> to vector<16x384xbf16>
    %c0_6 = arith.constant 0 : index
    %c0_7 = arith.constant 0 : index
    %15 = vector.load %arg4[%c0_6, %c0_7] : memref<16x384xbf16, #tpu.memory_space<vmem>>, vector<16x384xbf16>
    tpu.vector_store %arg4[%c0_6, %c0_7], %14 {strides = array<i32>} : memref<16x384xbf16, #tpu.memory_space<vmem>>, vector<16x384xbf16>,
    return
  }
  func.func @transform_0(%arg0: i32, %arg1: i32) -> (i32, i32) {
    %c0_i32 = arith.constant 0 : i32
    %c0_i32_0 = arith.constant 0 : i32
    return %arg0, %c0_i32 : i32, i32
  }
  func.func @transform_1(%arg0: i32, %arg1: i32) -> (i32, i32) {
    %c0_i32 = arith.constant 0 : i32
    %c0_i32_0 = arith.constant 0 : i32
    return %c0_i32, %arg1 : i32, i32
  }
  func.func @transform_2(%arg0: i32, %arg1: i32) -> (i32, i32) {
    %c0_i32 = arith.constant 0 : i32
    return %arg0, %arg1 : i32, i32
  }
}

</mosaic_0001>

<llo_original>
// kernel: tpu_custom_call.1
$region0: #{tpu_custom_call.1}
  #allocation0 [shape = 'u32[]', space=smem, size = 0x4, offset = 0x4, fixed_abs, tag = 'smem constant byte address 0x4 - core index']
  #allocation1 [shape = 'u32[144,128]{1,0:T(1,128)}', space=vmem, size = 0x12000, scoped, tag = 'internal scratch']
  %s0 = inlined_call_operand.hbm [shape: f32[16,32], index: 0, kind: input, shape index: {}]
  %s1 = inlined_call_operand.hbm [shape: bf16[32,768], index: 1, kind: input, shape index: {}]
  %s2 = inlined_call_operand.hbm [shape: bf16[16,768], index: 2, kind: output, shape index: {}]
  %s3 = sld [smem:[#allocation0]]
  $region49: #{tpu_custom_call.1} parent=0
    _
  %s5 = ssub.s32 1, %s3
  %s6 = scalar_select 0, %s5, %s3
  $region1: #{tpu_custom_call.1} parent=0
    #allocation2 [shape = 'u8[8192]{0}', space=vmem, size = 0x2000, scoped, tag = 'input window, operand 0, single buffered']
    #allocation3 [shape = 's32[2]{0}', space=sflag, size = 0x8, scoped, tag = 'scoped memory for tpu_custom_call.1']
    #allocation4 [shape = 's32[2]{0}', space=sflag, size = 0x8, scoped, tag = 'scoped memory for tpu_custom_call.1']
    #allocation5 [shape = 'u8[49152]{0}', space=vmem, size = 0xc000, scoped, tag = 'input window, operand 1']
    #allocation6 [shape = 's32[2]{0}', space=sflag, size = 0x8, scoped, tag = 'scoped memory for tpu_custom_call.1']
    #allocation7 [shape = 'u8[24576]{0}', space=vmem, size = 0x6000, scoped, tag = 'output window, operand 0']
    %7 = vsyncpa [#allocation3], 0
    %8 = vsyncpa [#allocation6], 0
    %s9 = scalar_lea.sflag [#allocation6], 1
    %10 = vsyncpa %s9, 0
    %11 = vsyncpa [#allocation4], 0
    %s12 = scalar_lea.sflag [#allocation4], 1
    %13 = vsyncpa %s12, 0
    loop: start=0, step=1, limit=4
    $region2: #{tpu_custom_call.1} parent=1 // loop_pre_header
      _
    $region3: #{tpu_custom_call.1} parent=1 // loop_header
      %s15 = sphi 0, %s19
      %p16 = scmp.ge.s32.totalorder %s15, 4
      %s22 = sphi 0, %s34
      %s23 = sphi 0, %s30
      %s24 = sphi 0, %s22
      %s25 = sphi 0, %s23
      %s26 = sphi 0, %s24
      %s27 = sphi 0, %s25
      %s37 = sphi 0, %s39
      %s40 = sphi 0, %s37
      %s41 = sphi 0, %s40
      %s57 = sphi 0, %s41
      %s63 = sphi 0, %s65
      %s66 = sphi 0, %s63
      %s67 = sphi 0, %s66
      %s83 = sphi 0, %s67
      %s91 = sphi 0, %s93
      %s94 = sphi 0, %s91
      %s95 = sphi 0, %s94
      %s111 = sphi 0, %s95
    $region4: #{tpu_custom_call.1} parent=1 // loop_header_branch
      %18 = sbr.rel (%p16) target = $region8
    $region5: #{tpu_custom_call.1} parent=1 // loop_body
      %s20 = ssub.s32 %s15, 1
      %s21 = ssub.s32 %s15, 2
      %s28 = sadd.s32 1, %s23
      %p29 = scmp.ge.s32.totalorder %s28, 2
      %s30 = scalar_select %p29, 0, %s28
      %s31 = sadd.s32 1, %s22
      %s32 = scalar_select %p29, %s31, %s22
      %p33 = scmp.ge.s32.totalorder %s32, 1
      %s34 = scalar_select %p33, 0, %s32
      %s35 = ssub.s32 %s22, %s34
      %p36 = scmp.eq.s32.totalorder %s35, 0
      %s38 = sadd.s32 %s37, 1
      %s39 = scalar_select %p36, %s37, %s38
      %p42 = pneg %p36
      %p43 = scmp.eq.s32.totalorder %s15, 1
      %p44 = por %p42, %p43
      %p45 = scmp.ne.s32.totalorder %s37, %s40
      %p46 = scmp.eq.s32.totalorder %s15, 0
      %p47 = por %p45, %p46
      %p48 = scmp.ne.s32.totalorder %s37, %s40
      %p49 = scmp.eq.s32.totalorder %s20, 1
      %p50 = por %p48, %p49
      %p51 = scmp.ne.s32.totalorder %s40, %s41
      %p52 = scmp.eq.s32.totalorder %s20, 0
      %p53 = por %p51, %p52
      %p54 = scmp.ne.s32.totalorder %s40, %s41
      %p55 = scmp.eq.s32.totalorder %s21, 1
      %p56 = por %p54, %p55
      %p58 = scmp.ne.s32.totalorder %s41, %s57
      %p59 = scmp.eq.s32.totalorder %s21, 0
      %p60 = por %p58, %p59
      %s61 = ssub.s32 %s23, %s30
      %p62 = scmp.eq.s32.totalorder %s61, 0
      %s64 = sadd.s32 %s63, 1
      %s65 = scalar_select %p62, %s63, %s64
      %p68 = pneg %p62
      %p69 = scmp.eq.s32.totalorder %s15, 1
      %p70 = por %p68, %p69
      %p71 = scmp.ne.s32.totalorder %s63, %s66
      %p72 = scmp.eq.s32.totalorder %s15, 0
      %p73 = por %p71, %p72
      %p74 = scmp.ne.s32.totalorder %s63, %s66
      %p75 = scmp.eq.s32.totalorder %s20, 1
      %p76 = por %p74, %p75
      %p77 = scmp.ne.s32.totalorder %s66, %s67
      %p78 = scmp.eq.s32.totalorder %s20, 0
      %p79 = por %p77, %p78
      %p80 = scmp.ne.s32.totalorder %s66, %s67
      %p81 = scmp.eq.s32.totalorder %s21, 1
      %p82 = por %p80, %p81
      %p84 = scmp.ne.s32.totalorder %s67, %s83
      %p85 = scmp.eq.s32.totalorder %s21, 0
      %p86 = por %p84, %p85
      %s87 = ssub.s32 %s22, %s34
      %s88 = ssub.s32 %s23, %s30
      %s89 = sor.u32 %s87, %s88
      %p90 = scmp.eq.s32.totalorder %s89, 0
      %s92 = sadd.s32 %s91, 1
      %s93 = scalar_select %p90, %s91, %s92
      %p96 = pneg %p90
      %p97 = scmp.eq.s32.totalorder %s15, 1
      %p98 = por %p96, %p97
      %p99 = scmp.ne.s32.totalorder %s91, %s94
      %p100 = scmp.eq.s32.totalorder %s15, 0
      %p101 = por %p99, %p100
      %p102 = scmp.ne.s32.totalorder %s91, %s94
      %p103 = scmp.eq.s32.totalorder %s20, 1
      %p104 = por %p102, %p103
      %p105 = scmp.ne.s32.totalorder %s94, %s95
      %p106 = scmp.eq.s32.totalorder %s20, 0
      %p107 = por %p105, %p106
      %p108 = scmp.ne.s32.totalorder %s94, %s95
      %p109 = scmp.eq.s32.totalorder %s21, 1
      %p110 = por %p108, %p109
      %p112 = scmp.ne.s32.totalorder %s95, %s111
      %p113 = scmp.eq.s32.totalorder %s21, 0
      %p114 = por %p112, %p113
      %p115 = scmp.le.s32.totalorder 1, %s15
      %p116 = scmp.lt.s32.totalorder %s15, 3
      %p117 = pnand %p115, %p116
      %p118 = pneg %p117
      // Predicated region
      $region9: #{tpu_custom_call.1} parent=5 // pred_check
        _
      $region10: #{tpu_custom_call.1} parent=5 // pred_check_branch
        %120 = sbr.rel (%p117) target = $region12
      $region11: #{tpu_custom_call.1} parent=5 // pred_region
        %s121 = ssub.s32 %s15, 1
        // Predicated region
        $region13: #{tpu_custom_call.1} parent=11 // pred_check
          %p122 = pneg %p53
        $region14: #{tpu_custom_call.1} parent=11 // pred_check_branch
          %124 = sbr.rel (%p122) target = $region16
        $region15: #{tpu_custom_call.1} parent=11 // pred_region
          %s125 = smul.u32 2, %s24
          %s127 = ssub.s32 256, 256
          %128 = vsyncadd [#allocation3], %s127
          %s129 = smul.addr %s125, 128
          %s130 = scalar_lea.hbm %s0, %s129
          %s131 = sshll.u32 [#allocation2], 4
          %s132 = int_to_ptr.vmem [resolvable:$true] %s131
          %137 = dma.hbm_to_vmem [thread:$0]  %s130, 256, %s132, [#allocation3], 128, 128, 8
        $region16: #{tpu_custom_call.1} parent=11 // pred_fallthru
          _
      $region12: #{tpu_custom_call.1} parent=5 // pred_fallthru
        _
      %p138 = scmp.lt.s32.totalorder %s15, 2
      // Predicated region
      $region17: #{tpu_custom_call.1} parent=5 // pred_check
        %p139 = pneg %p138
      $region18: #{tpu_custom_call.1} parent=5 // pred_check_branch
        %141 = sbr.rel (%p139) target = $region20
      $region19: #{tpu_custom_call.1} parent=5 // pred_region
        // Predicated region
        $region21: #{tpu_custom_call.1} parent=19 // pred_check
          %p142 = pneg %p73
        $region22: #{tpu_custom_call.1} parent=19 // pred_check_branch
          %144 = sbr.rel (%p142) target = $region24
        $region23: #{tpu_custom_call.1} parent=19 // pred_region
          %s145 = sand.u32 %s63, 1
          %s146 = scalar_lea.sflag [#allocation6], %s145
          %s147 = sand.u32 %s63, 1
          %s148 = smul.addr %s147, 48
          %s149 = scalar_lea.vmem [#allocation5], %s148
          %s150 = smul.u32 3, %s23
          %s152 = ssub.s32 768, 768
          %153 = vsyncadd %s146, %s152
          %s154 = smul.addr %s150, 64
          %s155 = scalar_lea.hbm %s1, %s154
          %s156 = sshll.u32 %s149, 4
          %s157 = int_to_ptr.vmem [resolvable:$true] %s156
          %162 = dma.hbm_to_vmem [thread:$0]  %s155, 768, %s157, %s146, 384, 192, 12
        $region24: #{tpu_custom_call.1} parent=19 // pred_fallthru
          _
      $region20: #{tpu_custom_call.1} parent=5 // pred_fallthru
        _
      %p163 = scmp.le.s32.totalorder 1, %s15
      %p164 = scmp.lt.s32.totalorder %s15, 3
      %p165 = pnand %p163, %p164
      %p166 = pneg %p165
      // Predicated region
      $region25: #{tpu_custom_call.1} parent=5 // pred_check
        _
      $region26: #{tpu_custom_call.1} parent=5 // pred_check_branch
        %168 = sbr.rel (%p165) target = $region28
      $region27: #{tpu_custom_call.1} parent=5 // pred_region
        %s169 = ssub.s32 %s15, 1
        // Predicated region
        $region29: #{tpu_custom_call.1} parent=27 // pred_check
          %p170 = pneg %p53
        $region30: #{tpu_custom_call.1} parent=27 // pred_check_branch
          %172 = sbr.rel (%p170) target = $region32
        $region31: #{tpu_custom_call.1} parent=27 // pred_region
          %173 = dma.done [#allocation3], 256
        $region32: #{tpu_custom_call.1} parent=27 // pred_fallthru
          _
        %s174 = sand.u32 %s66, 1
        %s175 = scalar_lea.sflag [#allocation6], %s174
        %s176 = sand.u32 %s66, 1
        %s177 = smul.addr %s176, 48
        %s178 = scalar_lea.vmem [#allocation5], %s177
        // Predicated region
        $region33: #{tpu_custom_call.1} parent=27 // pred_check
          %p179 = pneg %p79
        $region34: #{tpu_custom_call.1} parent=27 // pred_check_branch
          %181 = sbr.rel (%p179) target = $region36
        $region35: #{tpu_custom_call.1} parent=27 // pred_region
          %182 = dma.done %s175, 768
        $region36: #{tpu_custom_call.1} parent=27 // pred_fallthru
          _
        %p183 = pneg %p53
        %p184 = pneg %p50
        %s185 = sand.u32 %s66, 1
        %s186 = scalar_lea.sflag [#allocation6], %s185
        %s187 = sand.u32 %s66, 1
        %s188 = smul.addr %s187, 48
        %s189 = scalar_lea.vmem [#allocation5], %s188
        %p190 = pneg %p79
        %p191 = pneg %p76
        %p192 = pneg %p107
        %p193 = pneg %p104
        %s194 = sand.u32 %s94, 1
        %s195 = scalar_lea.sflag [#allocation4], %s194
        %s196 = sand.u32 %s94, 1
        %s197 = smul.addr %s196, 24
        %s198 = scalar_lea.vmem [#allocation7], %s197
        %s199 = smul.u32 2, %s24
        %s200 = smul.u32 3, %s25
        %s201 = smul.u32 2, %s24
        %s202 = smul.u32 3, %s25
        %v204 = vld [vmem:[#allocation2] sm:$0xff]
        %v205 = vld [vmem:[#allocation2 + $0x8] sm:$0xff]
        %v206 = vmul.f32 %v204, %v204
        %v207 = vmul.f32 %v205, %v205
        %vm208 = vcmask 261120
        %v209 = vsel %vm208, %v206, 0.0
        %210 = vadd.xlane.f32.xlu0 %v209
        %v211 = vpop.xlane.xlu0 %210
        %v212 = vsel %vm208, %v207, 0.0
        %213 = vadd.xlane.f32.xlu0 %v212
        %v214 = vpop.xlane.xlu0 %213
        %v215 = vrcp.pop 32.0
        %v216 = vmul.f32 %v211, %v215
        %v217 = vmul.f32 %v214, %v215
        %v218 = vadd.f32 %v216, 1.1920929e-07
        %v219 = vadd.f32 %v217, 1.1920929e-07
        %v220 = vrsqrt.pop %v218
        %v221 = vrsqrt.pop %v219
        %v222 = vmul.f32 %v204, %v220
        %v223 = vmul.f32 %v205, %v221
        %v224 = vpack.c.bf16 %v223, %v222
        %v225 = vld [vmem:[%s178] sm:$0xff]
        %v226 = vld [vmem:[%s178 + $0x8] sm:$0xf]
        %v227 = vld [vmem:[%s178 + $0xc] sm:$0xff]
        %v228 = vld [vmem:[%s178 + $0x14] sm:$0xf]
        %v229 = vld [vmem:[%s178 + $0x18] sm:$0xff]
        %v230 = vld [vmem:[%s178 + $0x20] sm:$0xf]
        %v231 = vld [vmem:[%s178 + $0x24] sm:$0xff]
        %v232 = vld [vmem:[%s178 + $0x2c] sm:$0xf]
        %v241 = vunpack.c.l.b16 %v225
        %v242 = vunpack.c.h.b16 %v225
        %v243 = vunpack.c.l.b16 %v226
        %v244 = vunpack.c.l.b16 %v227
        %v245 = vunpack.c.h.b16 %v227
        %v246 = vunpack.c.l.b16 %v228
        %v247 = vunpack.c.l.b16 %v229
        %v248 = vunpack.c.h.b16 %v229
        %v249 = vunpack.c.l.b16 %v230
        %v250 = vunpack.c.l.b16 %v231
        %v251 = vunpack.c.h.b16 %v231
        %v252 = vunpack.c.l.b16 %v232
        %v253 = vpack.c.b16 %v244, %v241
        %v254 = vpack.c.b16 %v245, %v242
        %v255 = vpack.c.b16 %v246, %v243
        %v256 = vpack.c.b16 %v250, %v247
        %v257 = vpack.c.b16 %v251, %v248
        %v258 = vpack.c.b16 %v252, %v249
        %v266 = vsel %vm208, %v224, 0
        %268 = vmatprep.subr.bf16.mxu0 %v254
        %269 = vmatpush1.bf16.msra.mxu0 %v253
        %270 = vmatprep.subr.bf16.mxu0 %v257
        %271 = vmatpush1.bf16.msra.mxu0 %v256
        %272 = vmatprep.subr.bf16.mxu0 0
        %273 = vmatpush1.bf16.msra.mxu0 0
        %274 = vmatprep.subr.bf16.mxu0 0
        %275 = vmatpush1.bf16.msra.mxu0 0
        %276 = vmatprep.subr.bf16.mxu0 0
        %277 = vmatpush1.bf16.msra.mxu0 0
        %278 = vmatprep.subr.bf16.mxu0 0
        %279 = vmatpush1.bf16.msra.mxu0 0
        %280 = vmatprep.subr.bf16.mxu0 0
        %281 = vmatpush1.bf16.msra.mxu0 0
        %282 = vmatprep.subr.bf16.mxu0 0
        %283 = vmatpush1.bf16.msra.mxu0 0
        %284 = vmatprep.subr.bf16.mxu0 0
        %285 = vmatpush1.bf16.msra.mxu0 0
        %286 = vmatprep.subr.bf16.mxu0 0
        %287 = vmatpush1.bf16.msra.mxu0 0
        %288 = vmatprep.subr.bf16.mxu0 0
        %289 = vmatpush1.bf16.msra.mxu0 0
        %290 = vmatprep.subr.bf16.mxu0 0
        %291 = vmatpush1.bf16.msra.mxu0 0
        %292 = vmatprep.subr.bf16.mxu0 0
        %293 = vmatpush1.bf16.msra.mxu0 0
        %294 = vmatprep.subr.bf16.mxu0 0
        %295 = vmatpush1.bf16.msra.mxu0 0
        %296 = vmatprep.subr.bf16.mxu0 0
        %297 = vmatpush1.bf16.msra.mxu0 0
        %298 = vmatprep.subr.bf16.mxu0 0
        %299 = vmatpush1.bf16.msra.mxu0 0
        %300 = vmatprep.mubr.bf16.mxu0 0
        %301 = vmatmul.mubr.bf16.gmra.mrb[0].mxu0 %v266
        %v302 = vpop.f32.mrb[0].mxu0
        %v303 = vadd.f32 0.0, %v302
        %v304 = vpop.f32.mrb[0].mxu0
        %v305 = vadd.f32 0.0, %v304
        %v306 = vpop.f32.mrb[0].mxu0
        %v307 = vadd.f32 0.0, %v306
        %v308 = vpop.f32.mrb[0].mxu0
        %v309 = vadd.f32 0.0, %v308
        %310 = vdwg.mxu0
        %311 = vmatprep.subr.bf16.mxu0 0
        %312 = vmatpush1.bf16.msra.mxu0 %v255
        %313 = vmatprep.subr.bf16.mxu0 0
        %314 = vmatpush1.bf16.msra.mxu0 %v258
        %315 = vmatprep.subr.bf16.mxu0 0
        %316 = vmatpush1.bf16.msra.mxu0 0
        %317 = vmatprep.subr.bf16.mxu0 0
        %318 = vmatpush1.bf16.msra.mxu0 0
        %319 = vmatprep.subr.bf16.mxu0 0
        %320 = vmatpush1.bf16.msra.mxu0 0
        %321 = vmatprep.subr.bf16.mxu0 0
        %322 = vmatpush1.bf16.msra.mxu0 0
        %323 = vmatprep.subr.bf16.mxu0 0
        %324 = vmatpush1.bf16.msra.mxu0 0
        %325 = vmatprep.subr.bf16.mxu0 0
        %326 = vmatpush1.bf16.msra.mxu0 0
        %327 = vmatprep.subr.bf16.mxu0 0
        %328 = vmatpush1.bf16.msra.mxu0 0
        %329 = vmatprep.subr.bf16.mxu0 0
        %330 = vmatpush1.bf16.msra.mxu0 0
        %331 = vmatprep.subr.bf16.mxu0 0
        %332 = vmatpush1.bf16.msra.mxu0 0
        %333 = vmatprep.subr.bf16.mxu0 0
        %334 = vmatpush1.bf16.msra.mxu0 0
        %335 = vmatprep.subr.bf16.mxu0 0
        %336 = vmatpush1.bf16.msra.mxu0 0
        %337 = vmatprep.subr.bf16.mxu0 0
        %338 = vmatpush1.bf16.msra.mxu0 0
        %339 = vmatprep.subr.bf16.mxu0 0
        %340 = vmatpush1.bf16.msra.mxu0 0
        %341 = vmatprep.subr.bf16.mxu0 0
        %342 = vmatpush1.bf16.msra.mxu0 0
        %343 = vmatprep.mubr.bf16.mxu0 0
        %344 = vmatmul.mubr.bf16.gmra.mrb[0].mxu0 %v266
        %v345 = vpop.f32.mrb[0].mxu0
        %v346 = vadd.f32 0.0, %v345
        %v347 = vpop.f32.mrb[0].mxu0
        %v348 = vpop.f32.mrb[0].mxu0
        %v349 = vadd.f32 0.0, %v348
        %v350 = vpop.f32.mrb[0].mxu0
        %351 = vdwg.mxu0
        %v352 = vpack.c.bf16 %v307, %v303
        %v353 = vpack.c.bf16 %v309, %v305
        %v354 = vpack.c.bf16 %v349, %v346
        %v358 = vunpack.c.l.b16 %v352
        %v359 = vunpack.c.l.b16 %v353
        %v360 = vunpack.c.l.b16 %v354
        %v361 = vunpack.c.h.b16 %v352
        %v362 = vunpack.c.h.b16 %v353
        %v363 = vunpack.c.h.b16 %v354
        %v364 = vpack.c.b16 %v359, %v358
        %v365 = vpack.c.b16 %v360, %v360
        %v366 = vpack.c.b16 %v362, %v361
        %v367 = vpack.c.b16 %v363, %v363
        %372 = vst [vmem:[%s198] sm:$0xff] %v364
        %373 = vst [vmem:[%s198 + $0x8] sm:$0xf] %v365
        %374 = vst [vmem:[%s198 + $0xc] sm:$0xff] %v366
        %375 = vst [vmem:[%s198 + $0x14] sm:$0xf] %v367
        %s376 = sand.u32 %s94, 1
        %s377 = scalar_lea.sflag [#allocation4], %s376
        %s378 = sand.u32 %s94, 1
        %s379 = smul.addr %s378, 24
        %s380 = scalar_lea.vmem [#allocation7], %s379
        // Predicated region
        $region37: #{tpu_custom_call.1} parent=27 // pred_check
          %p381 = pneg %p104
        $region38: #{tpu_custom_call.1} parent=27 // pred_check_branch
          %383 = sbr.rel (%p381) target = $region40
        $region39: #{tpu_custom_call.1} parent=27 // pred_region
          %s384 = smul.u32 2, %s24
          %s385 = smul.u32 3, %s25
          %s387 = ssub.s32 384, 384
          %388 = vsyncadd %s377, %s387
          %s389 = smul.addr %s384, 6
          %s390 = sadd.s32 %s385, %s389
          %s391 = smul.addr %s390, 64
          %s392 = scalar_lea.hbm %s2, %s391
          %s393 = sshll.u32 %s380, 4
          %s394 = int_to_ptr.vmem [resolvable:$true] %s393
          %399 = dma.vmem_to_hbm [thread:$0]  %s394, 384, %s392, %s377, 192, 384, 12
        $region40: #{tpu_custom_call.1} parent=27 // pred_fallthru
          _
      $region28: #{tpu_custom_call.1} parent=5 // pred_fallthru
        _
      %p400 = scmp.le.s32.totalorder 2, %s15
      // Predicated region
      $region41: #{tpu_custom_call.1} parent=5 // pred_check
        %p401 = pneg %p400
      $region42: #{tpu_custom_call.1} parent=5 // pred_check_branch
        %403 = sbr.rel (%p401) target = $region44
      $region43: #{tpu_custom_call.1} parent=5 // pred_region
        %s404 = ssub.s32 %s15, 2
        // Predicated region
        $region45: #{tpu_custom_call.1} parent=43 // pred_check
          %p405 = pneg %p110
        $region46: #{tpu_custom_call.1} parent=43 // pred_check_branch
          %407 = sbr.rel (%p405) target = $region48
        $region47: #{tpu_custom_call.1} parent=43 // pred_region
          %s408 = sand.u32 %s95, 1
          %s409 = scalar_lea.sflag [#allocation4], %s408
          %s410 = sand.u32 %s95, 1
          %s411 = smul.addr %s410, 24
          %s412 = scalar_lea.vmem [#allocation7], %s411
          %413 = dma.done %s409, 384
        $region48: #{tpu_custom_call.1} parent=43 // pred_fallthru
          _
      $region44: #{tpu_custom_call.1} parent=5 // pred_fallthru
        _
    $region6: #{tpu_custom_call.1} parent=1 // loop_footer
      %s19 = sadd.s32 1, %s15
    $region7: #{tpu_custom_call.1} parent=1 // loop_footer_branch
      %14 = sbr.rel target = $region3
    $region8: #{tpu_custom_call.1} parent=1 // loop_exit
      _
    %414 = vsyncpa [#allocation3], 1
    %s415 = scalar_lea.sflag [#allocation3], 1
    %416 = vsyncpa %s415, 1
    %417 = vsyncpa [#allocation6], 1
    %s418 = scalar_lea.sflag [#allocation6], 1
    %419 = vsyncpa %s418, 1
    %420 = vsyncpa [#allocation4], 1
    %s421 = scalar_lea.sflag [#allocation4], 1
    %422 = vsyncpa %s421, 1

</llo_original>
